<compile_context>
chip_gen: v7x
topology: tpu7x:2x2x1
jax: 0.10.0
libtpu: 0.0.40
codegen_flags: <defaults>
</compile_context>

<pallas_src>
import jax
import jax.numpy as jnp
from jax.experimental import pallas as pl
from jax.experimental.pallas import tpu as pltpu


def _round_up(v, m):
    return ((v + m - 1) // m) * m


def _choose_tile(dim, align, cap):
    """Largest multiple of `align` <= cap that divides `dim` (dim % align == 0)."""
    t = min(cap, dim)
    t -= t % align
    t = max(t, align)
    while t > align and dim % t != 0:
        t -= align
    return t


# ---------------- fast path: weight resident in VMEM, 1-D grid over M ----------------
def _linear_relu_resident_kernel(x_ref, w_ref, b_ref, o_ref):
    # x_ref: (tm, Kp), w_ref: (Kp, Np), b_ref: (1, Np), o_ref: (tm, Np)
    acc = jnp.dot(x_ref[...], w_ref[...], preferred_element_type=jnp.float32)
    o_ref[...] = jnp.maximum(acc + b_ref[...], 0.0).astype(o_ref.dtype)


# ---------------- general path: output-stationary (M, N, K) grid ----------------
def _linear_relu_tiled_kernel(x_ref, w_ref, b_ref, o_ref):
    # x_ref: (tm, tk), w_ref: (tk, tn), b_ref: (1, tn), o_ref: (tm, tn) f32 (resident over k)
    k = pl.program_id(2)

    @pl.when(k == 0)
    def _init():
        o_ref[...] = jnp.zeros_like(o_ref)

    o_ref[...] += jnp.dot(x_ref[...], w_ref[...], preferred_element_type=jnp.float32)

    @pl.when(k == pl.num_programs(2) - 1)
    def _finalize():
        o_ref[...] = jnp.maximum(o_ref[...] + b_ref[...], 0.0)


@jax.jit
def aggregation_forward(x, weight, bias):
    """Equivalent of nn.Sequential(nn.Linear(in, out, bias=True), nn.ReLU()).

    x:      (..., K) float32
    weight: (N, K)   float32  (PyTorch Linear convention)
    bias:   (N,)     float32
    returns (..., N) x.dtype
    """
    orig_shape = x.shape
    K = orig_shape[-1]
    x2 = x.reshape(-1, K).astype(jnp.float32)
    M = x2.shape[0]
    N, K2 = weight.shape
    assert K == K2, "weight inner dim must match x inner dim"

    # One-time transpose to (K, N): K on sublanes, N on lanes. Amortized over
    # all M-tile reuses; keeps the kernel's inner loop pure MXU work.
    wt = weight.astype(jnp.float32).T

    # Alignment padding only (no-op when dims are already (8, 128)-aligned).
    Mp = _round_up(M, 8)
    Kp = _round_up(K, 128)
    Np = _round_up(N, 128)
    xp = x2 if (Mp == M and Kp == K) else jnp.pad(x2, ((0, Mp - M), (0, Kp - K)))
    wp = wt if (Kp == K and Np == N) else jnp.pad(wt, ((0, Kp - K), (0, Np - N)))
    b32 = bias.astype(jnp.float32)
    bp = (b32 if Np == N else jnp.pad(b32, (0, Np - N))).reshape(1, Np)

    # -------- fast path: keep the whole weight resident in VMEM --------
    tm_fast = _choose_tile(Mp, 8, 512)
    # 2x for (conservatively) double-buffered weight/x/out tiles + bias row.
    fast_bytes = (2 * Kp * Np + 2 * tm_fast * Kp + 2 * tm_fast * Np + Np) * 4
    if fast_bytes <= 12 * 1024 * 1024:
        out = pl.pallas_call(
            _linear_relu_resident_kernel,
            out_shape=jax.ShapeDtypeStruct((Mp, Np), jnp.float32),
            grid_spec=pltpu.PrefetchScalarGridSpec(
                num_scalar_prefetch=0,
                grid=(Mp // tm_fast,),
                in_specs=[
                    pl.BlockSpec((tm_fast, Kp), lambda i: (i, 0)),  # x tile
                    pl.BlockSpec((Kp, Np), lambda i: (0, 0)),       # weight (resident)
                    pl.BlockSpec((1, Np), lambda i: (0, 0)),        # bias (resident)
                ],
                out_specs=pl.BlockSpec((tm_fast, Np), lambda i: (i, 0)),
            ),
            compiler_params=pltpu.CompilerParams(
                dimension_semantics=("parallel",),
            ),
            cost_estimate=pl.CostEstimate(
                flops=2 * M * K * N,
                transcendentals=0,
                bytes_accessed=4 * (Mp * Kp + Kp * Np + Mp * Np),
            ),
        )(xp, wp, bp)
    else:
        # -------- general path: tiled (M, N, K) grid, accumulate into o_ref --------
        tm = _choose_tile(Mp, 8, 512)
        tn = _choose_tile(Np, 128, 512)
        tk = _choose_tile(Kp, 128, 1024)
        # v7x megacore: keep at least 2 parallel grid blocks when shapes allow.
        if (Mp // tm) * (Np // tn) < 2:
            if Mp % 16 == 0 and Mp // 2 >= 8:
                tm = _choose_tile(Mp, 8, Mp // 2)
            elif Np % 256 == 0 and Np // 2 >= 128:
                tn = _choose_tile(Np, 128, Np // 2)
        grid = (Mp // tm, Np // tn, Kp // tk)
        out = pl.pallas_call(
            _linear_relu_tiled_kernel,
            out_shape=jax.ShapeDtypeStruct((Mp, Np), jnp.float32),
            grid_spec=pltpu.PrefetchScalarGridSpec(
                num_scalar_prefetch=0,
                grid=grid,
                in_specs=[
                    pl.BlockSpec((tm, tk), lambda i, j, k: (i, k)),  # x tile
                    pl.BlockSpec((tk, tn), lambda i, j, k: (k, j)),  # weight (K, N) tile
                    pl.BlockSpec((1, tn), lambda i, j, k: (0, j)),   # bias tile
                ],
                out_specs=pl.BlockSpec((tm, tn), lambda i, j, k: (i, j)),
            ),
            compiler_params=pltpu.CompilerParams(
                dimension_semantics=("parallel", "parallel", "arbitrary"),
            ),
            cost_estimate=pl.CostEstimate(
                flops=2 * M * K * N,
                transcendentals=0,
                bytes_accessed=4 * (Mp * Kp * (Np // tn)
                                    + Kp * Np * (Mp // tm)
                                    + Mp * Np),
            ),
        )(xp, wp, bp)

    out = out[:M, :N].astype(x.dtype)
    return out.reshape(orig_shape[:-1] + (N,))


if __name__ == "__main__":
    key = jax.random.PRNGKey(0)
    k_x, k_w, k_b = jax.random.split(key, 3)

    batch = 8
    input_dim = 32
    output_dim = 32

    # Deterministic synthetic parameters (PyTorch Linear shapes / init bounds).
    x = jax.random.normal(k_x, (batch, input_dim), dtype=jnp.float32)
    bound = 1.0 / (input_dim ** 0.5)
    weight = jax.random.uniform(
        k_w, (output_dim, input_dim), minval=-bound, maxval=bound, dtype=jnp.float32
    )
    bias = jax.random.uniform(
        k_b, (output_dim,), minval=-bound, maxval=bound, dtype=jnp.float32
    )

    out = aggregation_forward(x, weight, bias)
    out = jax.block_until_ready(out)

    # Reference check in plain JAX.
    ref = jnp.maximum(x @ weight.T + bias, 0.0)
    assert out.shape == (batch, output_dim)
    assert jnp.allclose(out, ref, atol=1e-5, rtol=1e-5)

    print("KERNEL_OK")
</pallas_src>

<mosaic_0001>
module attributes {stable_mosaic.version = 11 : i64} {
  func.func @_linear_relu_resident_kernel(%arg0: i32, %arg1: memref<8x128xf32, #tpu.memory_space<vmem>>, %arg2: memref<128x128xf32, #tpu.memory_space<vmem>>, %arg3: memref<1x128xf32, #tpu.memory_space<vmem>>, %arg4: memref<8x128xf32, #tpu.memory_space<vmem>>) attributes {dimension_semantics = [#tpu.dimension_semantics<parallel>], iteration_bounds = array<i64: 1>, scalar_prefetch = 0 : i64, scratch_operands = 0 : i64, tpu.core_type = #tpu.core_type<tc>, window_params = [{transform_indices = @transform_0, window_bounds = array<i64: 8, 128>}, {pipeline_mode = #tpu.pipeline_mode<synchronous>, transform_indices = @transform_1, window_bounds = array<i64: 128, 128>}, {pipeline_mode = #tpu.pipeline_mode<synchronous>, transform_indices = @transform_2, window_bounds = array<i64: 1, 128>}, {transform_indices = @transform_3, window_bounds = array<i64: 8, 128>}]} {
    %c0 = arith.constant 0 : index
    %c0_0 = arith.constant 0 : index
    %0 = vector.load %arg1[%c0, %c0_0] : memref<8x128xf32, #tpu.memory_space<vmem>>, vector<8x128xf32>
    %c0_1 = arith.constant 0 : index
    %c0_2 = arith.constant 0 : index
    %1 = vector.load %arg2[%c0_1, %c0_2] : memref<128x128xf32, #tpu.memory_space<vmem>>, vector<128x128xf32>
    %cst = arith.constant dense<0.000000e+00> : vector<8x128xf32>
    %2 = tpu.matmul %0, %1, %cst {dimension_numbers = #tpu.dot_dimension_numbers<[1], [0], [0], [1], [0, 0, 1, 1], [], []>} : vector<8x128xf32>, vector<128x128xf32>, vector<8x128xf32> -> vector<8x128xf32>
    %c0_3 = arith.constant 0 : index
    %c0_4 = arith.constant 0 : index
    %3 = vector.load %arg3[%c0_3, %c0_4] : memref<1x128xf32, #tpu.memory_space<vmem>>, vector<1x128xf32>
    %4 = vector.broadcast %3 : vector<1x128xf32> to vector<8x128xf32>
    %5 = arith.addf %2, %4 : vector<8x128xf32>
    %cst_5 = arith.constant 0.000000e+00 : f32
    %6 = vector.broadcast %cst_5 : f32 to vector<8x128xf32>
    %7 = arith.maximumf %5, %6 : vector<8x128xf32>
    %c0_6 = arith.constant 0 : index
    %c0_7 = arith.constant 0 : index
    %8 = vector.load %arg4[%c0_6, %c0_7] : memref<8x128xf32, #tpu.memory_space<vmem>>, vector<8x128xf32>
    tpu.vector_store %arg4[%c0_6, %c0_7], %7 {strides = array<i32>} : memref<8x128xf32, #tpu.memory_space<vmem>>, vector<8x128xf32>,
    return
  }
  func.func @transform_0(%arg0: i32) -> (i32, i32) {
    %c0_i32 = arith.constant 0 : i32
    %c0_i32_0 = arith.constant 0 : i32
    return %arg0, %c0_i32 : i32, i32
  }
  func.func @transform_1(%arg0: i32) -> (i32, i32) {
    %c0_i32 = arith.constant 0 : i32
    %c0_i32_0 = arith.constant 0 : i32
    %c0_i32_1 = arith.constant 0 : i32
    return %c0_i32, %c0_i32_0 : i32, i32
  }
  func.func @transform_2(%arg0: i32) -> (i32, i32) {
    %c0_i32 = arith.constant 0 : i32
    %c0_i32_0 = arith.constant 0 : i32
    %c0_i32_1 = arith.constant 0 : i32
    return %c0_i32, %c0_i32_0 : i32, i32
  }
  func.func @transform_3(%arg0: i32) -> (i32, i32) {
    %c0_i32 = arith.constant 0 : i32
    %c0_i32_0 = arith.constant 0 : i32
    return %arg0, %c0_i32 : i32, i32
  }
}

</mosaic_0001>

<llo_original>
// kernel: aggregation_forward.1
$region0: #{aggregation_forward.1}
  #allocation0 [shape = 'u32[]', space=smem, size = 0x4, offset = 0x4, fixed_abs, tag = 'smem constant byte address 0x4 - core index']
  #allocation1 [shape = 'u32[144,128]{1,0:T(1,128)}', space=vmem, size = 0x12000, scoped, tag = 'internal scratch']
  %s0 = inlined_call_operand.vmem [shape: f32[8,128], index: 0, kind: input, shape index: {}]
  %s1 = inlined_call_operand.vmem [shape: f32[128,128], index: 1, kind: input, shape index: {}]
  %s2 = inlined_call_operand.vmem [shape: f32[1,128], index: 2, kind: input, shape index: {}]
  %s3 = inlined_call_operand.hbm [shape: f32[8,128], index: 3, kind: output, shape index: {}]
  %s4 = sld [smem:[#allocation0]]
  $region22: #{aggregation_forward.1} parent=0
    _
  %s6 = ssub.s32 1, %s4
  %s7 = scalar_select 0, %s6, %s4
  $region1: #{aggregation_forward.1} parent=0
    #allocation2 [shape = 'u8[4096]{0}', space=vmem, size = 0x1000, scoped, tag = 'output window, operand 0, single buffered']
    #allocation3 [shape = 's32[1]{0}', space=sflag, size = 0x4, scoped, tag = 'scoped memory for aggregation_forward.1']
    %8 = vsyncpa [#allocation3], 0
    // Predicated region
    $region2: #{aggregation_forward.1} parent=1 // pred_check
      _
    $region3: #{aggregation_forward.1} parent=1 // pred_check_branch
      %10 = sbr.rel (0) target = $region5
    $region4: #{aggregation_forward.1} parent=1 // pred_region
      _
    $region5: #{aggregation_forward.1} parent=1 // pred_fallthru
      _
    // Predicated region
    $region6: #{aggregation_forward.1} parent=1 // pred_check
      _
    $region7: #{aggregation_forward.1} parent=1 // pred_check_branch
      %12 = sbr.rel (0) target = $region9
    $region8: #{aggregation_forward.1} parent=1 // pred_region
      _
    $region9: #{aggregation_forward.1} parent=1 // pred_fallthru
      _
    // Predicated region
    $region10: #{aggregation_forward.1} parent=1 // pred_check
      _
    $region11: #{aggregation_forward.1} parent=1 // pred_check_branch
      %14 = sbr.rel (0) target = $region13
    $region12: #{aggregation_forward.1} parent=1 // pred_region
      _
    $region13: #{aggregation_forward.1} parent=1 // pred_fallthru
      _
    %v15 = vld [vmem:[%s0] sm:$0xff]
    %v16 = vld [vmem:[%s1] sm:$0xff]
    %v17 = vld [vmem:[%s1 + $0x8] sm:$0xff]
    %v18 = vld [vmem:[%s1 + $0x10] sm:$0xff]
    %v19 = vld [vmem:[%s1 + $0x18] sm:$0xff]
    %v20 = vld [vmem:[%s1 + $0x20] sm:$0xff]
    %v21 = vld [vmem:[%s1 + $0x28] sm:$0xff]
    %v22 = vld [vmem:[%s1 + $0x30] sm:$0xff]
    %v23 = vld [vmem:[%s1 + $0x38] sm:$0xff]
    %v24 = vld [vmem:[%s1 + $0x40] sm:$0xff]
    %v25 = vld [vmem:[%s1 + $0x48] sm:$0xff]
    %v26 = vld [vmem:[%s1 + $0x50] sm:$0xff]
    %v27 = vld [vmem:[%s1 + $0x58] sm:$0xff]
    %v28 = vld [vmem:[%s1 + $0x60] sm:$0xff]
    %v29 = vld [vmem:[%s1 + $0x68] sm:$0xff]
    %v30 = vld [vmem:[%s1 + $0x70] sm:$0xff]
    %v31 = vld [vmem:[%s1 + $0x78] sm:$0xff]
    %v32 = vld [vmem:[%s2] sm:$0x1]
    %v34 = vlaneseq
    %v35 = vshrl.u32 %v34, 7
    %v36 = vsub.s32 0, %v35
    %v37 = vrot.slane %v32, %v36
    %39 = vmatprep.subr.mxu0 0.0
    %40 = vmatpush1.msra.mxu0 %v16
    %41 = vmatprep.subr.mxu0 0.0
    %42 = vmatpush1.msra.mxu0 %v17
    %43 = vmatprep.subr.mxu0 0.0
    %44 = vmatpush1.msra.mxu0 %v18
    %45 = vmatprep.subr.mxu0 0.0
    %46 = vmatpush1.msra.mxu0 %v19
    %47 = vmatprep.subr.mxu0 0.0
    %48 = vmatpush1.msra.mxu0 %v20
    %49 = vmatprep.subr.mxu0 0.0
    %50 = vmatpush1.msra.mxu0 %v21
    %51 = vmatprep.subr.mxu0 0.0
    %52 = vmatpush1.msra.mxu0 %v22
    %53 = vmatprep.subr.mxu0 0.0
    %54 = vmatpush1.msra.mxu0 %v23
    %55 = vmatprep.subr.mxu0 0.0
    %56 = vmatpush1.msra.mxu0 %v24
    %57 = vmatprep.subr.mxu0 0.0
    %58 = vmatpush1.msra.mxu0 %v25
    %59 = vmatprep.subr.mxu0 0.0
    %60 = vmatpush1.msra.mxu0 %v26
    %61 = vmatprep.subr.mxu0 0.0
    %62 = vmatpush1.msra.mxu0 %v27
    %63 = vmatprep.subr.mxu0 0.0
    %64 = vmatpush1.msra.mxu0 %v28
    %65 = vmatprep.subr.mxu0 0.0
    %66 = vmatpush1.msra.mxu0 %v29
    %67 = vmatprep.subr.mxu0 0.0
    %68 = vmatpush1.msra.mxu0 %v30
    %69 = vmatprep.subr.mxu0 0.0
    %70 = vmatpush1.msra.mxu0 %v31
    %71 = vmatprep.subr.mxu0 0.0
    %72 = vmatpush1.msra.mxu0 0.0
    %73 = vmatprep.subr.mxu0 0.0
    %74 = vmatpush1.msra.mxu0 0.0
    %75 = vmatprep.subr.mxu0 0.0
    %76 = vmatpush1.msra.mxu0 0.0
    %77 = vmatprep.subr.mxu0 0.0
    %78 = vmatpush1.msra.mxu0 0.0
    %79 = vmatprep.subr.mxu0 0.0
    %80 = vmatpush1.msra.mxu0 0.0
    %81 = vmatprep.subr.mxu0 0.0
    %82 = vmatpush1.msra.mxu0 0.0
    %83 = vmatprep.subr.mxu0 0.0
    %84 = vmatpush1.msra.mxu0 0.0
    %85 = vmatprep.subr.mxu0 0.0
    %86 = vmatpush1.msra.mxu0 0.0
    %87 = vmatprep.subr.mxu0 0.0
    %88 = vmatpush1.msra.mxu0 0.0
    %89 = vmatprep.subr.mxu0 0.0
    %90 = vmatpush1.msra.mxu0 0.0
    %91 = vmatprep.subr.mxu0 0.0
    %92 = vmatpush1.msra.mxu0 0.0
    %93 = vmatprep.subr.mxu0 0.0
    %94 = vmatpush1.msra.mxu0 0.0
    %95 = vmatprep.subr.mxu0 0.0
    %96 = vmatpush1.msra.mxu0 0.0
    %97 = vmatprep.subr.mxu0 0.0
    %98 = vmatpush1.msra.mxu0 0.0
    %99 = vmatprep.subr.mxu0 0.0
    %100 = vmatpush1.msra.mxu0 0.0
    %101 = vmatprep.subr.mxu0 0.0
    %102 = vmatpush1.msra.mxu0 0.0
    %103 = vmatprep.mubr.f32.mxu0 0.0
    %104 = vmatmul.mubr.f32.gmra.mrb[0].mxu0 %v15
    %v105 = vpop.f32.mrb[0].mxu0
    %v106 = vadd.f32 %v37, %v105
    %v107 = vpop.f32.mrb[0].mxu0
    %108 = vdwg.mxu0
    %v109 = vmax.f32 %v106, 0.0
    %110 = vst [vmem:[#allocation2] sm:$0xff] %v109
    // Predicated region
    $region14: #{aggregation_forward.1} parent=1 // pred_check
      _
    $region15: #{aggregation_forward.1} parent=1 // pred_check_branch
      %112 = sbr.rel (0) target = $region17
    $region16: #{aggregation_forward.1} parent=1 // pred_region
      %s114 = ssub.s32 128, 128
      %115 = vsyncadd [#allocation3], %s114
      %s117 = sshll.u32 [#allocation2], 4
      %s118 = int_to_ptr.vmem [resolvable:$true] %s117
      %120 = dma.vmem_to_hbm [thread:$0]  %s118, 128, %s3, [#allocation3]
    $region17: #{aggregation_forward.1} parent=1 // pred_fallthru
      _
    // Predicated region
    $region18: #{aggregation_forward.1} parent=1 // pred_check
      _
    $region19: #{aggregation_forward.1} parent=1 // pred_check_branch
      %122 = sbr.rel (0) target = $region21
    $region20: #{aggregation_forward.1} parent=1 // pred_region
      %123 = dma.done [#allocation3], 128
    $region21: #{aggregation_forward.1} parent=1 // pred_fallthru
      _
    %124 = vsyncpa [#allocation3], 1

</llo_original>
